<compile_context>
chip_gen: v7x
topology: tpu7x:2x2x1
jax: 0.10.0
libtpu: 0.0.40
codegen_flags: <defaults>
</compile_context>

<pallas_src>
import math
import functools

import jax
import jax.numpy as jnp
from jax import lax
from jax.experimental import pallas as pl
from jax.experimental.pallas import tpu as pltpu


def _round_up(x, mult):
    return ((x + mult - 1) // mult) * mult


def _vmem_budgets():
    """Generation-aware (scoped VMEM limit, weight-tile budget) in bytes."""
    phys = None
    try:
        info = pltpu.get_tpu_info()
        phys = getattr(info, "vmem_capacity_bytes", None)
    except Exception:
        phys = None
    if phys is None:
        # Unknown generation: conservative settings safe on every chip.
        return 48 << 20, 12 << 20
    if phys <= (64 << 20):
        # v7x-class: 64 MiB physical per TensorCore -> leave headroom.
        return 48 << 20, 14 << 20
    # v5e / v6e: 128 MiB physical VMEM.
    return 96 << 20, 28 << 20


def _pick_tile_c(n_classes, d, tile_b, budget_bytes, itemsize=4):
    """Largest lane-aligned C tile whose double-buffered weight tile plus the
    (tile_b, tile_c) VMEM accumulator fit the budget."""
    per_col = 2 * d * itemsize + tile_b * itemsize
    max_tile = max(128, (budget_bytes // per_col) // 128 * 128)
    return min(max_tile, _round_up(n_classes, 128))


def _uce_kernel(label_ref, x_ref, w_ref, bias_ref, out_ref,
                xn_ref, acc_ref,
                *, m, s, batch, n_classes, tile_b, tile_c,
                mask_cols, mask_rows):
    b = pl.program_id(0)
    c = pl.program_id(1)
    n_c = pl.num_programs(1)

    @pl.when(c == 0)
    def _init():
        # Hoisted x normalization: computed once per batch block, reused for
        # every class tile.  F.normalize(., eps=1e-5) == x * rsqrt(max(|x|^2, 1e-10)).
        x = x_ref[...]
        xn_ref[...] = x * lax.rsqrt(
            jnp.maximum(jnp.sum(x * x, axis=-1, keepdims=True), 1e-10))
        acc_ref[...] = jnp.zeros_like(acc_ref)

    xn = xn_ref[...]          # (TILE_B, D)      f32, hoisted
    w = w_ref[...]            # (TILE_C, D)      f32, streamed tile
    labels = label_ref[...]   # (TILE_B, 1)      i32, resident
    bias = bias_ref[0, 0]     # scalar f32 from SMEM

    wn = w * lax.rsqrt(jnp.maximum(jnp.sum(w * w, axis=-1, keepdims=True), 1e-10))

    # cos_theta = xn @ wn^T as a contraction on the shared D axis.
    cos_theta = lax.dot_general(
        xn, wn,
        dimension_numbers=(((1,), (1,)), ((), ())),
        preferred_element_type=jnp.float32)          # (TILE_B, TILE_C)

    # Negative-branch softplus over the whole tile.
    n_loss = jnp.log(1.0 + jnp.exp(jnp.clip(s * cos_theta - bias, -s, s)))

    col = jax.lax.broadcasted_iota(jnp.int32, cos_theta.shape, 1) + c * tile_c
    one_hot = col == labels                          # (TILE_B, TILE_C) bool

    # Masks are only emitted when the corresponding padding exists (trace time).
    if mask_cols:
        n_loss = jnp.where(col < n_classes, n_loss, 0.0)
    if mask_rows:
        row = jax.lax.broadcasted_iota(jnp.int32, (tile_b, 1), 0) + b * tile_b
        n_loss = jnp.where(row < batch, n_loss, 0.0)

    # Positive-branch softplus only at the label column of each row.
    cos_label = jnp.sum(jnp.where(one_hot, cos_theta, 0.0), axis=-1, keepdims=True)
    c_start = c * tile_c
    in_tile = jnp.logical_and(labels >= c_start, labels < c_start + tile_c)
    p_vec = jnp.log(1.0 + jnp.exp(-jnp.clip(s * (cos_label - m) - bias, -s, s)))
    n_at_label = jnp.log(1.0 + jnp.exp(jnp.clip(s * cos_label - bias, -s, s)))
    corr = jnp.where(in_tile, p_vec - n_at_label, 0.0)   # (TILE_B, 1)

    # Vector accumulation in VMEM; no per-step cross-lane reduce / SMEM write.
    acc_ref[...] += n_loss
    acc_ref[:, 0:1] = acc_ref[:, 0:1] + corr

    @pl.when(c == n_c - 1)
    def _finalize():
        out_ref[0, 0] = jnp.sum(acc_ref[...])


def unified_cross_entropy_loss(x, label, weight, bias, *, m=0.4, s=64.0,
                               tile_c=None, tile_b=None):
    """x: (B, D) f32, label: (B,) int, weight: (C, D) f32, bias: scalar f32."""
    B, D = x.shape
    C, D2 = weight.shape
    assert D == D2

    vmem_limit, w_budget = _vmem_budgets()

    # Batch tiling (sublane-aligned).  Small batches stay in a single block;
    # large batches are blocked so the resident x stays bounded and the
    # leading "parallel" axis can be split across TensorCores (v7x).
    if tile_b is None:
        tile_b = _round_up(B, 8) if B <= 512 else 256
    tile_b = max(8, _round_up(tile_b, 8))
    b_pad = _round_up(B, tile_b)
    num_b_blocks = b_pad // tile_b

    if tile_c is None:
        tile_c = _pick_tile_c(C, D, tile_b, w_budget)
    tile_c = max(128, (tile_c // 128) * 128)          # lane-aligned multiple of 128
    c_pad = _round_up(C, tile_c)
    num_c_tiles = c_pad // tile_c

    if c_pad != C:
        weight = jnp.pad(weight, ((0, c_pad - C), (0, 0)))
    label = label.astype(jnp.int32)
    if b_pad != B:
        x = jnp.pad(x, ((0, b_pad - B), (0, 0)))
        label = jnp.pad(label, ((0, b_pad - B),), constant_values=-1)

    label2d = label.reshape(b_pad, 1)
    bias2d = jnp.asarray(bias, jnp.float32).reshape(1, 1)

    kernel = functools.partial(
        _uce_kernel, m=float(m), s=float(s), batch=B, n_classes=C,
        tile_b=tile_b, tile_c=tile_c,
        mask_cols=(c_pad != C), mask_rows=(b_pad != B))

    cost = pl.CostEstimate(
        flops=2 * b_pad * c_pad * D + 3 * (b_pad * D * num_c_tiles // num_c_tiles
                                           + c_pad * D) + 4 * b_pad * c_pad,
        transcendentals=2 * b_pad * c_pad + 4 * b_pad * num_c_tiles,
        bytes_accessed=4 * (b_pad * D + c_pad * D + b_pad + 1 + num_b_blocks),
    )

    partial_sums = pl.pallas_call(
        kernel,
        out_shape=jax.ShapeDtypeStruct((num_b_blocks, 1), jnp.float32),
        grid_spec=pltpu.PrefetchScalarGridSpec(
            num_scalar_prefetch=0,
            grid=(num_b_blocks, num_c_tiles),
            in_specs=[
                pl.BlockSpec((tile_b, 1), lambda b, c: (b, 0)),          # labels
                pl.BlockSpec((tile_b, D), lambda b, c: (b, 0)),          # x
                pl.BlockSpec((tile_c, D), lambda b, c: (c, 0)),          # weight (streamed)
                pl.BlockSpec((1, 1), lambda b, c: (0, 0),
                             memory_space=pltpu.MemorySpace.SMEM),       # bias scalar
            ],
            out_specs=pl.BlockSpec((1, 1), lambda b, c: (b, 0),
                                   memory_space=pltpu.MemorySpace.SMEM), # per-b-block sum
            scratch_shapes=[
                pltpu.VMEM((tile_b, D), jnp.float32),                    # hoisted xn
                pltpu.VMEM((tile_b, tile_c), jnp.float32),               # vector accumulator
            ]),
        compiler_params=pltpu.CompilerParams(
            dimension_semantics=("parallel", "arbitrary"),
            vmem_limit_bytes=vmem_limit,
        ),
        cost_estimate=cost,
    )(label2d, x, weight, bias2d)

    # Per-batch-block partial sums -> mean over the original batch.
    return jnp.sum(partial_sums) * (1.0 / B)


def _reference(x, label, weight, bias, m=0.4, s=64.0):
    xn = x / jnp.maximum(jnp.linalg.norm(x, axis=-1, keepdims=True), 1e-05)
    wn = weight / jnp.maximum(jnp.linalg.norm(weight, axis=-1, keepdims=True), 1e-05)
    cos = xn @ wn.T
    cmp_ = s * (cos - m) - bias
    cmn_ = s * cos - bias
    p_loss = jnp.log(1.0 + jnp.exp(-jnp.clip(cmp_, -s, s)))
    n_loss = jnp.log(1.0 + jnp.exp(jnp.clip(cmn_, -s, s)))
    one_hot = jax.nn.one_hot(label, weight.shape[0], dtype=jnp.bool_)
    loss = jnp.where(one_hot, p_loss, n_loss)
    return loss.sum(axis=1).mean()


if __name__ == "__main__":
    in_features = 64
    m, s = 0.4, 64.0
    key = jax.random.PRNGKey(0)

    cases = [
        dict(B=8, C=512, tile_c=None),   # single auto-sized C tile, no padding
        dict(B=8, C=400, tile_c=None),   # padded class columns
        dict(B=6, C=640, tile_c=256),    # multi-tile C + padded rows & classes
    ]
    for cfg in cases:
        key, kx, kw, kl = jax.random.split(key, 4)
        B, C = cfg["B"], cfg["C"]
        x = jax.random.normal(kx, (B, in_features), dtype=jnp.float32)
        # kaiming_normal_(a=1, mode='fan_in', leaky_relu): std = 1/sqrt(fan_in)
        w_std = 1.0 / math.sqrt(in_features)
        weight = w_std * jax.random.normal(kw, (C, in_features), dtype=jnp.float32)
        bias = jnp.float32(math.log(C * 10))
        label = jax.random.randint(kl, (B,), 0, C, dtype=jnp.int32)

        loss = unified_cross_entropy_loss(x, label, weight, bias, m=m, s=s,
                                          tile_c=cfg["tile_c"])
        jax.block_until_ready(loss)

        ref = _reference(x, label, weight, bias, m=m, s=s)
        assert jnp.allclose(loss, ref, rtol=1e-4, atol=1e-4), (cfg, loss, ref)

    print("KERNEL_OK")
</pallas_src>

<mosaic_0001>
module attributes {stable_mosaic.version = 11 : i64} {
  func.func @_uce_kernel(%arg0: i32, %arg1: i32, %arg2: memref<8x1xi32, #tpu.memory_space<vmem>>, %arg3: memref<8x64xf32, #tpu.memory_space<vmem>>, %arg4: memref<512x64xf32, #tpu.memory_space<vmem>>, %arg5: memref<1x1xf32, #tpu.memory_space<smem>>, %arg6: memref<1x1xf32, #tpu.memory_space<smem>>, %arg7: memref<8x64xf32, #tpu.memory_space<vmem>>, %arg8: memref<8x512xf32, #tpu.memory_space<vmem>>) attributes {dimension_semantics = [#tpu.dimension_semantics<parallel>, #tpu.dimension_semantics<arbitrary>], iteration_bounds = array<i64: 1, 1>, scalar_prefetch = 0 : i64, scratch_operands = 2 : i64, tpu.core_type = #tpu.core_type<tc>, window_params = [{transform_indices = @transform_0, window_bounds = array<i64: 8, 1>}, {transform_indices = @transform_1, window_bounds = array<i64: 8, 64>}, {transform_indices = @transform_2, window_bounds = array<i64: 512, 64>}, {transform_indices = @transform_3, window_bounds = array<i64: 1, 1>}, {transform_indices = @transform_4, window_bounds = array<i64: 1, 1>}]} {
    %c0_i32 = arith.constant 0 : i32
    %0 = arith.cmpi eq, %arg1, %c0_i32 : i32
    %1 = arith.extui %0 : i1 to i32
    %c0_i32_0 = arith.constant 0 : i32
    %2 = arith.cmpi ne, %1, %c0_i32_0 : i32
    scf.if %2 {
      %c0_39 = arith.constant 0 : index
      %c0_40 = arith.constant 0 : index
      %85 = vector.load %arg3[%c0_39, %c0_40] : memref<8x64xf32, #tpu.memory_space<vmem>>, vector<8x64xf32>
      %86 = arith.mulf %85, %85 : vector<8x64xf32>
      %cst_41 = arith.constant dense<0.000000e+00> : vector<8xf32>
      %87 = vector.multi_reduction <add>, %86, %cst_41 [1] : vector<8x64xf32> to vector<8xf32>
      %88 = vector.shape_cast %87 : vector<8xf32> to vector<8x1xf32>
      %cst_42 = arith.constant 1.000000e-10 : f32
      %89 = vector.broadcast %cst_42 : f32 to vector<8x1xf32>
      %90 = arith.maximumf %88, %89 : vector<8x1xf32>
      %91 = math.rsqrt %90 : vector<8x1xf32>
      %92 = vector.broadcast %91 : vector<8x1xf32> to vector<8x64xf32>
      %93 = arith.mulf %85, %92 : vector<8x64xf32>
      %c0_43 = arith.constant 0 : index
      %c0_44 = arith.constant 0 : index
      %94 = vector.load %arg7[%c0_43, %c0_44] : memref<8x64xf32, #tpu.memory_space<vmem>>, vector<8x64xf32>
      tpu.vector_store %arg7[%c0_43, %c0_44], %93 {strides = array<i32>} : memref<8x64xf32, #tpu.memory_space<vmem>>, vector<8x64xf32>,
      %cst_45 = arith.constant 0.000000e+00 : f32
      %95 = vector.broadcast %cst_45 : f32 to vector<8x512xf32>
      %c0_46 = arith.constant 0 : index
      %c0_47 = arith.constant 0 : index
      %96 = vector.load %arg8[%c0_46, %c0_47] : memref<8x512xf32, #tpu.memory_space<vmem>>, vector<8x512xf32>
      tpu.vector_store %arg8[%c0_46, %c0_47], %95 {strides = array<i32>} : memref<8x512xf32, #tpu.memory_space<vmem>>, vector<8x512xf32>,
    } else {
    }
    %c0 = arith.constant 0 : index
    %c0_1 = arith.constant 0 : index
    %3 = vector.load %arg7[%c0, %c0_1] : memref<8x64xf32, #tpu.memory_space<vmem>>, vector<8x64xf32>
    %c0_2 = arith.constant 0 : index
    %c0_3 = arith.constant 0 : index
    %4 = vector.load %arg4[%c0_2, %c0_3] : memref<512x64xf32, #tpu.memory_space<vmem>>, vector<512x64xf32>
    %c0_4 = arith.constant 0 : index
    %c0_5 = arith.constant 0 : index
    %5 = vector.load %arg2[%c0_4, %c0_5] : memref<8x1xi32, #tpu.memory_space<vmem>>, vector<8x1xi32>
    %c0_6 = arith.constant 0 : index
    %c0_7 = arith.constant 0 : index
    %6 = memref.load %arg5[%c0_6, %c0_7] : memref<1x1xf32, #tpu.memory_space<smem>>
    %7 = arith.mulf %4, %4 : vector<512x64xf32>
    %cst = arith.constant dense<0.000000e+00> : vector<512xf32>
    %8 = vector.multi_reduction <add>, %7, %cst [1] : vector<512x64xf32> to vector<512xf32>
    %9 = vector.shape_cast %8 : vector<512xf32> to vector<512x1xf32>
    %cst_8 = arith.constant 1.000000e-10 : f32
    %10 = vector.broadcast %cst_8 : f32 to vector<512x1xf32>
    %11 = arith.maximumf %9, %10 : vector<512x1xf32>
    %12 = math.rsqrt %11 : vector<512x1xf32>
    %13 = vector.broadcast %12 : vector<512x1xf32> to vector<512x64xf32>
    %14 = arith.mulf %4, %13 : vector<512x64xf32>
    %cst_9 = arith.constant dense<0.000000e+00> : vector<8x512xf32>
    %15 = tpu.matmul %3, %14, %cst_9 {dimension_numbers = #tpu.dot_dimension_numbers<[1], [1], [0], [0], [0, 0, 1, 0], [], []>} : vector<8x64xf32>, vector<512x64xf32>, vector<8x512xf32> -> vector<8x512xf32>
    %cst_10 = arith.constant 6.400000e+01 : f32
    %16 = vector.broadcast %cst_10 : f32 to vector<8x512xf32>
    %17 = arith.mulf %16, %15 : vector<8x512xf32>
    %18 = vector.broadcast %6 : f32 to vector<8x512xf32>
    %19 = arith.subf %17, %18 : vector<8x512xf32>
    %cst_11 = arith.constant -6.400000e+01 : f32
    %cst_12 = arith.constant 6.400000e+01 : f32
    %20 = vector.broadcast %cst_11 : f32 to vector<8x512xf32>
    %21 = arith.maximumf %20, %19 : vector<8x512xf32>
    %22 = vector.broadcast %cst_12 : f32 to vector<8x512xf32>
    %23 = arith.minimumf %22, %21 : vector<8x512xf32>
    %24 = math.exp %23 : vector<8x512xf32>
    %cst_13 = arith.constant 1.000000e+00 : f32
    %25 = vector.broadcast %cst_13 : f32 to vector<8x512xf32>
    %26 = arith.addf %25, %24 : vector<8x512xf32>
    %27 = math.log %26 : vector<8x512xf32>
    %28 = tpu.iota {dimensions = array<i32: 1>} : vector<8x512xi32>
    %c512_i32 = arith.constant 512 : i32
    %29 = arith.muli %arg1, %c512_i32 : i32
    %30 = vector.broadcast %29 : i32 to vector<8x512xi32>
    %31 = arith.addi %28, %30 : vector<8x512xi32>
    %32 = vector.broadcast %5 : vector<8x1xi32> to vector<8x512xi32>
    %33 = arith.cmpi eq, %31, %32 : vector<8x512xi32>
    %cst_14 = arith.constant 0.000000e+00 : f32
    %34 = vector.broadcast %cst_14 : f32 to vector<8x512xf32>
    %35 = arith.select %33, %15, %34 : vector<8x512xi1>, vector<8x512xf32>
    %cst_15 = arith.constant dense<0.000000e+00> : vector<8xf32>
    %36 = vector.multi_reduction <add>, %35, %cst_15 [1] : vector<8x512xf32> to vector<8xf32>
    %37 = vector.shape_cast %36 : vector<8xf32> to vector<8x1xf32>
    %c512_i32_16 = arith.constant 512 : i32
    %38 = arith.muli %arg1, %c512_i32_16 : i32
    %39 = vector.broadcast %38 : i32 to vector<8x1xi32>
    %40 = arith.cmpi sge, %5, %39 : vector<8x1xi32>
    %c512_i32_17 = arith.constant 512 : i32
    %41 = arith.addi %38, %c512_i32_17 : i32
    %42 = vector.broadcast %41 : i32 to vector<8x1xi32>
    %43 = arith.cmpi slt, %5, %42 : vector<8x1xi32>
    %44 = arith.andi %40, %43 : vector<8x1xi1>
    %cst_18 = arith.constant 4.000000e-01 : f32
    %45 = vector.broadcast %cst_18 : f32 to vector<8x1xf32>
    %46 = arith.subf %37, %45 : vector<8x1xf32>
    %cst_19 = arith.constant 6.400000e+01 : f32
    %47 = vector.broadcast %cst_19 : f32 to vector<8x1xf32>
    %48 = arith.mulf %47, %46 : vector<8x1xf32>
    %49 = vector.broadcast %6 : f32 to vector<8x1xf32>
    %50 = arith.subf %48, %49 : vector<8x1xf32>
    %cst_20 = arith.constant -6.400000e+01 : f32
    %cst_21 = arith.constant 6.400000e+01 : f32
    %51 = vector.broadcast %cst_20 : f32 to vector<8x1xf32>
    %52 = arith.maximumf %51, %50 : vector<8x1xf32>
    %53 = vector.broadcast %cst_21 : f32 to vector<8x1xf32>
    %54 = arith.minimumf %53, %52 : vector<8x1xf32>
    %cst_22 = arith.constant 0.000000e+00 : f32
    %55 = vector.broadcast %cst_22 : f32 to vector<8x1xf32>
    %56 = arith.subf %55, %54 : vector<8x1xf32>
    %57 = math.exp %56 : vector<8x1xf32>
    %cst_23 = arith.constant 1.000000e+00 : f32
    %58 = vector.broadcast %cst_23 : f32 to vector<8x1xf32>
    %59 = arith.addf %58, %57 : vector<8x1xf32>
    %60 = math.log %59 : vector<8x1xf32>
    %cst_24 = arith.constant 6.400000e+01 : f32
    %61 = vector.broadcast %cst_24 : f32 to vector<8x1xf32>
    %62 = arith.mulf %61, %37 : vector<8x1xf32>
    %63 = vector.broadcast %6 : f32 to vector<8x1xf32>
    %64 = arith.subf %62, %63 : vector<8x1xf32>
    %cst_25 = arith.constant -6.400000e+01 : f32
    %cst_26 = arith.constant 6.400000e+01 : f32
    %65 = vector.broadcast %cst_25 : f32 to vector<8x1xf32>
    %66 = arith.maximumf %65, %64 : vector<8x1xf32>
    %67 = vector.broadcast %cst_26 : f32 to vector<8x1xf32>
    %68 = arith.minimumf %67, %66 : vector<8x1xf32>
    %69 = math.exp %68 : vector<8x1xf32>
    %cst_27 = arith.constant 1.000000e+00 : f32
    %70 = vector.broadcast %cst_27 : f32 to vector<8x1xf32>
    %71 = arith.addf %70, %69 : vector<8x1xf32>
    %72 = math.log %71 : vector<8x1xf32>
    %73 = arith.subf %60, %72 : vector<8x1xf32>
    %cst_28 = arith.constant 0.000000e+00 : f32
    %74 = vector.broadcast %cst_28 : f32 to vector<8x1xf32>
    %75 = arith.select %44, %73, %74 : vector<8x1xi1>, vector<8x1xf32>
    %c0_29 = arith.constant 0 : index
    %c0_30 = arith.constant 0 : index
    %76 = vector.load %arg8[%c0_29, %c0_30] : memref<8x512xf32, #tpu.memory_space<vmem>>, vector<8x512xf32>
    %77 = arith.addf %76, %27 : vector<8x512xf32>
    %c0_31 = arith.constant 0 : index
    %c0_32 = arith.constant 0 : index
    %78 = vector.load %arg8[%c0_31, %c0_32] : memref<8x512xf32, #tpu.memory_space<vmem>>, vector<8x512xf32>
    tpu.vector_store %arg8[%c0_31, %c0_32], %77 {strides = array<i32>} : memref<8x512xf32, #tpu.memory_space<vmem>>, vector<8x512xf32>,
    %c0_33 = arith.constant 0 : index
    %c0_34 = arith.constant 0 : index
    %79 = vector.load %arg8[%c0_33, %c0_34] : memref<8x512xf32, #tpu.memory_space<vmem>>, vector<8x1xf32>
    %80 = arith.addf %79, %75 : vector<8x1xf32>
    %c0_35 = arith.constant 0 : index
    %c0_36 = arith.constant 0 : index
    %81 = vector.load %arg8[%c0_35, %c0_36] : memref<8x512xf32, #tpu.memory_space<vmem>>, vector<8x1xf32>
    tpu.vector_store %arg8[%c0_35, %c0_36], %80 {strides = array<i32>} : memref<8x512xf32, #tpu.memory_space<vmem>>, vector<8x1xf32>,
    %c0_i32_37 = arith.constant 0 : i32
    %82 = arith.cmpi eq, %arg1, %c0_i32_37 : i32
    %83 = arith.extui %82 : i1 to i32
    %c0_i32_38 = arith.constant 0 : i32
    %84 = arith.cmpi ne, %83, %c0_i32_38 : i32
    scf.if %84 {
      %c0_39 = arith.constant 0 : index
      %c0_40 = arith.constant 0 : index
      %85 = vector.load %arg8[%c0_39, %c0_40] : memref<8x512xf32, #tpu.memory_space<vmem>>, vector<8x512xf32>
      %86 = vector.shape_cast %85 : vector<8x512xf32> to vector<1x8x512xf32>
      %cst_41 = arith.constant dense<0.000000e+00> : vector<1xf32>
      %87 = vector.multi_reduction <add>, %86, %cst_41 [1, 2] : vector<1x8x512xf32> to vector<1xf32>
      %88 = vector.shape_cast %87 : vector<1xf32> to vector<1x1x1xf32>
      %89 = vector.extract %88[0, 0, 0] : f32 from vector<1x1x1xf32>
      %c0_42 = arith.constant 0 : index
      %c0_43 = arith.constant 0 : index
      %90 = memref.load %arg6[%c0_42, %c0_43] : memref<1x1xf32, #tpu.memory_space<smem>>
      memref.store %89, %arg6[%c0_42, %c0_43] : memref<1x1xf32, #tpu.memory_space<smem>>
    } else {
    }
    return
  }
  func.func @transform_0(%arg0: i32, %arg1: i32) -> (i32, i32) {
    %c0_i32 = arith.constant 0 : i32
    %c0_i32_0 = arith.constant 0 : i32
    return %arg0, %c0_i32 : i32, i32
  }
  func.func @transform_1(%arg0: i32, %arg1: i32) -> (i32, i32) {
    %c0_i32 = arith.constant 0 : i32
    %c0_i32_0 = arith.constant 0 : i32
    return %arg0, %c0_i32 : i32, i32
  }
  func.func @transform_2(%arg0: i32, %arg1: i32) -> (i32, i32) {
    %c0_i32 = arith.constant 0 : i32
    %c0_i32_0 = arith.constant 0 : i32
    return %arg1, %c0_i32 : i32, i32
  }
  func.func @transform_3(%arg0: i32, %arg1: i32) -> (i32, i32) {
    %c0_i32 = arith.constant 0 : i32
    %c0_i32_0 = arith.constant 0 : i32
    %c0_i32_1 = arith.constant 0 : i32
    return %c0_i32, %c0_i32_0 : i32, i32
  }
  func.func @transform_4(%arg0: i32, %arg1: i32) -> (i32, i32) {
    %c0_i32 = arith.constant 0 : i32
    %c0_i32_0 = arith.constant 0 : i32
    return %arg0, %c0_i32 : i32, i32
  }
}

</mosaic_0001>

<llo_original>
// kernel: tpu_custom_call.1
$region0: #{tpu_custom_call.1}
  #allocation0 [shape = 'u32[]', space=smem, size = 0x4, offset = 0x4, fixed_abs, tag = 'smem constant byte address 0x4 - core index']
  #allocation1 [shape = 'u32[144,128]{1,0:T(1,128)}', space=vmem, size = 0x12000, scoped, tag = 'internal scratch']
  #allocation2 [shape = 'f32[8,64]{1,0:T(8,128)}', space=vmem, size = 0x1000, scoped, tag = 'scratch operand']
  #allocation3 [shape = 'f32[8,512]{1,0:T(8,128)}', space=vmem, size = 0x4000, scoped, tag = 'scratch operand']
  #allocation4 [shape = 'f32[1,1]{1,0:T(1,128)S(6)}', space=smem, size = 0x200, scoped, tag = 'scoped memory for tpu_custom_call.1']
  %s0 = inlined_call_operand.vmem [shape: s32[8,1], index: 0, kind: input, shape index: {}]
  %s1 = inlined_call_operand.vmem [shape: f32[8,64], index: 1, kind: input, shape index: {}]
  %s2 = inlined_call_operand.vmem [shape: f32[512,64], index: 2, kind: input, shape index: {}]
  %s3 = inlined_call_operand.<no memory space> [shape: f32[1,1], index: 3, kind: input, shape index: {}]
  %s4 = inlined_call_operand.hbm [shape: f32[1,1], index: 4, kind: output, shape index: {}]
  %s5 = sld [smem:[#allocation0]]
  $region34: #{tpu_custom_call.1} parent=0
    _
  %s7 = ssub.s32 1, %s5
  %s8 = scalar_select 0, %s7, %s5
  %9 = sst [smem:[#allocation4]] %s3
  $region1: #{tpu_custom_call.1} parent=0
    #allocation5 [shape = 'u8[512]{0}', space=smem, size = 0x200, scoped, tag = 'output window, operand 0, single buffered']
    #allocation6 [shape = 's32[1]{0}', space=sflag, size = 0x4, scoped, tag = 'scoped memory for tpu_custom_call.1']
    %10 = vsyncpa [#allocation6], 0
    // Predicated region
    $region2: #{tpu_custom_call.1} parent=1 // pred_check
      _
    $region3: #{tpu_custom_call.1} parent=1 // pred_check_branch
      %12 = sbr.rel (0) target = $region5
    $region4: #{tpu_custom_call.1} parent=1 // pred_region
      _
    $region5: #{tpu_custom_call.1} parent=1 // pred_fallthru
      _
    // Predicated region
    $region6: #{tpu_custom_call.1} parent=1 // pred_check
      _
    $region7: #{tpu_custom_call.1} parent=1 // pred_check_branch
      %14 = sbr.rel (0) target = $region9
    $region8: #{tpu_custom_call.1} parent=1 // pred_region
      _
    $region9: #{tpu_custom_call.1} parent=1 // pred_fallthru
      _
    // Predicated region
    $region10: #{tpu_custom_call.1} parent=1 // pred_check
      _
    $region11: #{tpu_custom_call.1} parent=1 // pred_check_branch
      %16 = sbr.rel (0) target = $region13
    $region12: #{tpu_custom_call.1} parent=1 // pred_region
      _
    $region13: #{tpu_custom_call.1} parent=1 // pred_fallthru
      _
    // Predicated region
    $region14: #{tpu_custom_call.1} parent=1 // pred_check
      _
    $region15: #{tpu_custom_call.1} parent=1 // pred_check_branch
      %18 = sbr.rel (0) target = $region17
    $region16: #{tpu_custom_call.1} parent=1 // pred_region
      _
    $region17: #{tpu_custom_call.1} parent=1 // pred_fallthru
      _
    %p19 = scmp.eq.s32.totalorder 0, 0
    // Predicated region
    $region18: #{tpu_custom_call.1} parent=1 // pred_check
      %p20 = pneg %p19
    $region19: #{tpu_custom_call.1} parent=1 // pred_check_branch
      %22 = sbr.rel (%p20) target = $region21
    $region20: #{tpu_custom_call.1} parent=1 // pred_region
      %v23 = vld [vmem:[%s1] sm:$0xff]
      %v24 = vmul.f32 %v23, %v23
      %vm25 = vcmask 523264
      %v26 = vsel %vm25, %v24, 0.0
      %27 = vadd.xlane.f32.xlu0 %v26
      %v28 = vpop.xlane.xlu0 %27
      %v29 = vmax.f32 %v28, 1e-10
      %v30 = vrsqrt.pop %v29
      %v31 = vmul.f32 %v23, %v30
      %32 = vst.msk [vmem:[#allocation2] sm:$0xff] %vm25, %v31
      %33 = vst [vmem:[#allocation3] sm:$0xff] 0.0
      %34 = vst [vmem:[#allocation3 + $0x8] sm:$0xff] 0.0
      %35 = vst [vmem:[#allocation3 + $0x10] sm:$0xff] 0.0
      %36 = vst [vmem:[#allocation3 + $0x18] sm:$0xff] 0.0
    $region21: #{tpu_custom_call.1} parent=1 // pred_fallthru
      _
    %v37 = vld [vmem:[#allocation2] sm:$0xff]
    %v38 = vld [vmem:[%s2] sm:$0xff]
    %v39 = vld [vmem:[%s2 + $0x8] sm:$0xff]
    %v40 = vld [vmem:[%s2 + $0x10] sm:$0xff]
    %v41 = vld [vmem:[%s2 + $0x18] sm:$0xff]
    %v42 = vld [vmem:[%s2 + $0x20] sm:$0xff]
    %v43 = vld [vmem:[%s2 + $0x28] sm:$0xff]
    %v44 = vld [vmem:[%s2 + $0x30] sm:$0xff]
    %v45 = vld [vmem:[%s2 + $0x38] sm:$0xff]
    %v46 = vld [vmem:[%s2 + $0x40] sm:$0xff]
    %v47 = vld [vmem:[%s2 + $0x48] sm:$0xff]
    %v48 = vld [vmem:[%s2 + $0x50] sm:$0xff]
    %v49 = vld [vmem:[%s2 + $0x58] sm:$0xff]
    %v50 = vld [vmem:[%s2 + $0x60] sm:$0xff]
    %v51 = vld [vmem:[%s2 + $0x68] sm:$0xff]
    %v52 = vld [vmem:[%s2 + $0x70] sm:$0xff]
    %v53 = vld [vmem:[%s2 + $0x78] sm:$0xff]
    %v54 = vld [vmem:[%s2 + $0x80] sm:$0xff]
    %v55 = vld [vmem:[%s2 + $0x88] sm:$0xff]
    %v56 = vld [vmem:[%s2 + $0x90] sm:$0xff]
    %v57 = vld [vmem:[%s2 + $0x98] sm:$0xff]
    %v58 = vld [vmem:[%s2 + $0xa0] sm:$0xff]
    %v59 = vld [vmem:[%s2 + $0xa8] sm:$0xff]
    %v60 = vld [vmem:[%s2 + $0xb0] sm:$0xff]
    %v61 = vld [vmem:[%s2 + $0xb8] sm:$0xff]
    %v62 = vld [vmem:[%s2 + $0xc0] sm:$0xff]
    %v63 = vld [vmem:[%s2 + $0xc8] sm:$0xff]
    %v64 = vld [vmem:[%s2 + $0xd0] sm:$0xff]
    %v65 = vld [vmem:[%s2 + $0xd8] sm:$0xff]
    %v66 = vld [vmem:[%s2 + $0xe0] sm:$0xff]
    %v67 = vld [vmem:[%s2 + $0xe8] sm:$0xff]
    %v68 = vld [vmem:[%s2 + $0xf0] sm:$0xff]
    %v69 = vld [vmem:[%s2 + $0xf8] sm:$0xff]
    %v70 = vld [vmem:[%s2 + $0x100] sm:$0xff]
    %v71 = vld [vmem:[%s2 + $0x108] sm:$0xff]
    %v72 = vld [vmem:[%s2 + $0x110] sm:$0xff]
    %v73 = vld [vmem:[%s2 + $0x118] sm:$0xff]
    %v74 = vld [vmem:[%s2 + $0x120] sm:$0xff]
    %v75 = vld [vmem:[%s2 + $0x128] sm:$0xff]
    %v76 = vld [vmem:[%s2 + $0x130] sm:$0xff]
    %v77 = vld [vmem:[%s2 + $0x138] sm:$0xff]
    %v78 = vld [vmem:[%s2 + $0x140] sm:$0xff]
    %v79 = vld [vmem:[%s2 + $0x148] sm:$0xff]
    %v80 = vld [vmem:[%s2 + $0x150] sm:$0xff]
    %v81 = vld [vmem:[%s2 + $0x158] sm:$0xff]
    %v82 = vld [vmem:[%s2 + $0x160] sm:$0xff]
    %v83 = vld [vmem:[%s2 + $0x168] sm:$0xff]
    %v84 = vld [vmem:[%s2 + $0x170] sm:$0xff]
    %v85 = vld [vmem:[%s2 + $0x178] sm:$0xff]
    %v86 = vld [vmem:[%s2 + $0x180] sm:$0xff]
    %v87 = vld [vmem:[%s2 + $0x188] sm:$0xff]
    %v88 = vld [vmem:[%s2 + $0x190] sm:$0xff]
    %v89 = vld [vmem:[%s2 + $0x198] sm:$0xff]
    %v90 = vld [vmem:[%s2 + $0x1a0] sm:$0xff]
    %v91 = vld [vmem:[%s2 + $0x1a8] sm:$0xff]
    %v92 = vld [vmem:[%s2 + $0x1b0] sm:$0xff]
    %v93 = vld [vmem:[%s2 + $0x1b8] sm:$0xff]
    %v94 = vld [vmem:[%s2 + $0x1c0] sm:$0xff]
    %v95 = vld [vmem:[%s2 + $0x1c8] sm:$0xff]
    %v96 = vld [vmem:[%s2 + $0x1d0] sm:$0xff]
    %v97 = vld [vmem:[%s2 + $0x1d8] sm:$0xff]
    %v98 = vld [vmem:[%s2 + $0x1e0] sm:$0xff]
    %v99 = vld [vmem:[%s2 + $0x1e8] sm:$0xff]
    %v100 = vld [vmem:[%s2 + $0x1f0] sm:$0xff]
    %v101 = vld [vmem:[%s2 + $0x1f8] sm:$0xff]
    %v102 = vld [vmem:[%s0] sm:$0xff]
    %s103 = sld [smem:[#allocation4]]
    %v104 = vmul.f32 %v38, %v38
    %v105 = vmul.f32 %v39, %v39
    %v106 = vmul.f32 %v40, %v40
    %v107 = vmul.f32 %v41, %v41
    %v108 = vmul.f32 %v42, %v42
    %v109 = vmul.f32 %v43, %v43
    %v110 = vmul.f32 %v44, %v44
    %v111 = vmul.f32 %v45, %v45
    %v112 = vmul.f32 %v46, %v46
    %v113 = vmul.f32 %v47, %v47
    %v114 = vmul.f32 %v48, %v48
    %v115 = vmul.f32 %v49, %v49
    %v116 = vmul.f32 %v50, %v50
    %v117 = vmul.f32 %v51, %v51
    %v118 = vmul.f32 %v52, %v52
    %v119 = vmul.f32 %v53, %v53
    %v120 = vmul.f32 %v54, %v54
    %v121 = vmul.f32 %v55, %v55
    %v122 = vmul.f32 %v56, %v56
    %v123 = vmul.f32 %v57, %v57
    %v124 = vmul.f32 %v58, %v58
    %v125 = vmul.f32 %v59, %v59
    %v126 = vmul.f32 %v60, %v60
    %v127 = vmul.f32 %v61, %v61
    %v128 = vmul.f32 %v62, %v62
    %v129 = vmul.f32 %v63, %v63
    %v130 = vmul.f32 %v64, %v64
    %v131 = vmul.f32 %v65, %v65
    %v132 = vmul.f32 %v66, %v66
    %v133 = vmul.f32 %v67, %v67
    %v134 = vmul.f32 %v68, %v68
    %v135 = vmul.f32 %v69, %v69
    %v136 = vmul.f32 %v70, %v70
    %v137 = vmul.f32 %v71, %v71
    %v138 = vmul.f32 %v72, %v72
    %v139 = vmul.f32 %v73, %v73
    %v140 = vmul.f32 %v74, %v74
    %v141 = vmul.f32 %v75, %v75
    %v142 = vmul.f32 %v76, %v76
    %v143 = vmul.f32 %v77, %v77
    %v144 = vmul.f32 %v78, %v78
    %v145 = vmul.f32 %v79, %v79
    %v146 = vmul.f32 %v80, %v80
    %v147 = vmul.f32 %v81, %v81
    %v148 = vmul.f32 %v82, %v82
    %v149 = vmul.f32 %v83, %v83
    %v150 = vmul.f32 %v84, %v84
    %v151 = vmul.f32 %v85, %v85
    %v152 = vmul.f32 %v86, %v86
    %v153 = vmul.f32 %v87, %v87
    %v154 = vmul.f32 %v88, %v88
    %v155 = vmul.f32 %v89, %v89
    %v156 = vmul.f32 %v90, %v90
    %v157 = vmul.f32 %v91, %v91
    %v158 = vmul.f32 %v92, %v92
    %v159 = vmul.f32 %v93, %v93
    %v160 = vmul.f32 %v94, %v94
    %v161 = vmul.f32 %v95, %v95
    %v162 = vmul.f32 %v96, %v96
    %v163 = vmul.f32 %v97, %v97
    %v164 = vmul.f32 %v98, %v98
    %v165 = vmul.f32 %v99, %v99
    %v166 = vmul.f32 %v100, %v100
    %v167 = vmul.f32 %v101, %v101
    %vm168 = vcmask 523264
    %v169 = vsel %vm168, %v104, 0.0
    %170 = vadd.xlane.f32.xlu0 %v169
    %v171 = vpop.xlane.xlu0 %170
    %v172 = vsel %vm168, %v105, 0.0
    %173 = vadd.xlane.f32.xlu0 %v172
    %v174 = vpop.xlane.xlu0 %173
    %v175 = vsel %vm168, %v106, 0.0
    %176 = vadd.xlane.f32.xlu0 %v175
    %v177 = vpop.xlane.xlu0 %176
    %v178 = vsel %vm168, %v107, 0.0
    %179 = vadd.xlane.f32.xlu0 %v178
    %v180 = vpop.xlane.xlu0 %179
    %v181 = vsel %vm168, %v108, 0.0
    %182 = vadd.xlane.f32.xlu0 %v181
    %v183 = vpop.xlane.xlu0 %182
    %v184 = vsel %vm168, %v109, 0.0
    %185 = vadd.xlane.f32.xlu0 %v184
    %v186 = vpop.xlane.xlu0 %185
    %v187 = vsel %vm168, %v110, 0.0
    %188 = vadd.xlane.f32.xlu0 %v187
    %v189 = vpop.xlane.xlu0 %188
    %v190 = vsel %vm168, %v111, 0.0
    %191 = vadd.xlane.f32.xlu0 %v190
    %v192 = vpop.xlane.xlu0 %191
    %v193 = vsel %vm168, %v112, 0.0
    %194 = vadd.xlane.f32.xlu0 %v193
    %v195 = vpop.xlane.xlu0 %194
    %v196 = vsel %vm168, %v113, 0.0
    %197 = vadd.xlane.f32.xlu0 %v196
    %v198 = vpop.xlane.xlu0 %197
    %v199 = vsel %vm168, %v114, 0.0
    %200 = vadd.xlane.f32.xlu0 %v199
    %v201 = vpop.xlane.xlu0 %200
    %v202 = vsel %vm168, %v115, 0.0
    %203 = vadd.xlane.f32.xlu0 %v202
    %v204 = vpop.xlane.xlu0 %203
    %v205 = vsel %vm168, %v116, 0.0
    %206 = vadd.xlane.f32.xlu0 %v205
    %v207 = vpop.xlane.xlu0 %206
    %v208 = vsel %vm168, %v117, 0.0
    %209 = vadd.xlane.f32.xlu0 %v208
    %v210 = vpop.xlane.xlu0 %209
    %v211 = vsel %vm168, %v118, 0.0
    %212 = vadd.xlane.f32.xlu0 %v211
    %v213 = vpop.xlane.xlu0 %212
    %v214 = vsel %vm168, %v119, 0.0
    %215 = vadd.xlane.f32.xlu0 %v214
    %v216 = vpop.xlane.xlu0 %215
    %v217 = vsel %vm168, %v120, 0.0
    %218 = vadd.xlane.f32.xlu0 %v217
    %v219 = vpop.xlane.xlu0 %218
    %v220 = vsel %vm168, %v121, 0.0
    %221 = vadd.xlane.f32.xlu0 %v220
    %v222 = vpop.xlane.xlu0 %221
    %v223 = vsel %vm168, %v122, 0.0
    %224 = vadd.xlane.f32.xlu0 %v223
    %v225 = vpop.xlane.xlu0 %224
    %v226 = vsel %vm168, %v123, 0.0
    %227 = vadd.xlane.f32.xlu0 %v226
    %v228 = vpop.xlane.xlu0 %227
    %v229 = vsel %vm168, %v124, 0.0
    %230 = vadd.xlane.f32.xlu0 %v229
    %v231 = vpop.xlane.xlu0 %230
    %v232 = vsel %vm168, %v125, 0.0
    %233 = vadd.xlane.f32.xlu0 %v232
    %v234 = vpop.xlane.xlu0 %233
    %v235 = vsel %vm168, %v126, 0.0
    %236 = vadd.xlane.f32.xlu0 %v235
    %v237 = vpop.xlane.xlu0 %236
    %v238 = vsel %vm168, %v127, 0.0
    %239 = vadd.xlane.f32.xlu0 %v238
    %v240 = vpop.xlane.xlu0 %239
    %v241 = vsel %vm168, %v128, 0.0
    %242 = vadd.xlane.f32.xlu0 %v241
    %v243 = vpop.xlane.xlu0 %242
    %v244 = vsel %vm168, %v129, 0.0
    %245 = vadd.xlane.f32.xlu0 %v244
    %v246 = vpop.xlane.xlu0 %245
    %v247 = vsel %vm168, %v130, 0.0
    %248 = vadd.xlane.f32.xlu0 %v247
    %v249 = vpop.xlane.xlu0 %248
    %v250 = vsel %vm168, %v131, 0.0
    %251 = vadd.xlane.f32.xlu0 %v250
    %v252 = vpop.xlane.xlu0 %251
    %v253 = vsel %vm168, %v132, 0.0
    %254 = vadd.xlane.f32.xlu0 %v253
    %v255 = vpop.xlane.xlu0 %254
    %v256 = vsel %vm168, %v133, 0.0
    %257 = vadd.xlane.f32.xlu0 %v256
    %v258 = vpop.xlane.xlu0 %257
    %v259 = vsel %vm168, %v134, 0.0
    %260 = vadd.xlane.f32.xlu0 %v259
    %v261 = vpop.xlane.xlu0 %260
    %v262 = vsel %vm168, %v135, 0.0
    %263 = vadd.xlane.f32.xlu0 %v262
    %v264 = vpop.xlane.xlu0 %263
    %v265 = vsel %vm168, %v136, 0.0
    %266 = vadd.xlane.f32.xlu0 %v265
    %v267 = vpop.xlane.xlu0 %266
    %v268 = vsel %vm168, %v137, 0.0
    %269 = vadd.xlane.f32.xlu0 %v268
    %v270 = vpop.xlane.xlu0 %269
    %v271 = vsel %vm168, %v138, 0.0
    %272 = vadd.xlane.f32.xlu0 %v271
    %v273 = vpop.xlane.xlu0 %272
    %v274 = vsel %vm168, %v139, 0.0
    %275 = vadd.xlane.f32.xlu0 %v274
    %v276 = vpop.xlane.xlu0 %275
    %v277 = vsel %vm168, %v140, 0.0
    %278 = vadd.xlane.f32.xlu0 %v277
    %v279 = vpop.xlane.xlu0 %278
    %v280 = vsel %vm168, %v141, 0.0
    %281 = vadd.xlane.f32.xlu0 %v280
    %v282 = vpop.xlane.xlu0 %281
    %v283 = vsel %vm168, %v142, 0.0
    %284 = vadd.xlane.f32.xlu0 %v283
    %v285 = vpop.xlane.xlu0 %284
    %v286 = vsel %vm168, %v143, 0.0
    %287 = vadd.xlane.f32.xlu0 %v286
    %v288 = vpop.xlane.xlu0 %287
    %v289 = vsel %vm168, %v144, 0.0
    %290 = vadd.xlane.f32.xlu0 %v289
    %v291 = vpop.xlane.xlu0 %290
    %v292 = vsel %vm168, %v145, 0.0
    %293 = vadd.xlane.f32.xlu0 %v292
    %v294 = vpop.xlane.xlu0 %293
    %v295 = vsel %vm168, %v146, 0.0
    %296 = vadd.xlane.f32.xlu0 %v295
    %v297 = vpop.xlane.xlu0 %296
    %v298 = vsel %vm168, %v147, 0.0
    %299 = vadd.xlane.f32.xlu0 %v298
    %v300 = vpop.xlane.xlu0 %299
    %v301 = vsel %vm168, %v148, 0.0
    %302 = vadd.xlane.f32.xlu0 %v301
    %v303 = vpop.xlane.xlu0 %302
    %v304 = vsel %vm168, %v149, 0.0
    %305 = vadd.xlane.f32.xlu0 %v304
    %v306 = vpop.xlane.xlu0 %305
    %v307 = vsel %vm168, %v150, 0.0
    %308 = vadd.xlane.f32.xlu0 %v307
    %v309 = vpop.xlane.xlu0 %308
    %v310 = vsel %vm168, %v151, 0.0
    %311 = vadd.xlane.f32.xlu0 %v310
    %v312 = vpop.xlane.xlu0 %311
    %v313 = vsel %vm168, %v152, 0.0
    %314 = vadd.xlane.f32.xlu0 %v313
    %v315 = vpop.xlane.xlu0 %314
    %v316 = vsel %vm168, %v153, 0.0
    %317 = vadd.xlane.f32.xlu0 %v316
    %v318 = vpop.xlane.xlu0 %317
    %v319 = vsel %vm168, %v154, 0.0
    %320 = vadd.xlane.f32.xlu0 %v319
    %v321 = vpop.xlane.xlu0 %320
    %v322 = vsel %vm168, %v155, 0.0
    %323 = vadd.xlane.f32.xlu0 %v322
    %v324 = vpop.xlane.xlu0 %323
    %v325 = vsel %vm168, %v156, 0.0
    %326 = vadd.xlane.f32.xlu0 %v325
    %v327 = vpop.xlane.xlu0 %326
    %v328 = vsel %vm168, %v157, 0.0
    %329 = vadd.xlane.f32.xlu0 %v328
    %v330 = vpop.xlane.xlu0 %329
    %v331 = vsel %vm168, %v158, 0.0
    %332 = vadd.xlane.f32.xlu0 %v331
    %v333 = vpop.xlane.xlu0 %332
    %v334 = vsel %vm168, %v159, 0.0
    %335 = vadd.xlane.f32.xlu0 %v334
    %v336 = vpop.xlane.xlu0 %335
    %v337 = vsel %vm168, %v160, 0.0
    %338 = vadd.xlane.f32.xlu0 %v337
    %v339 = vpop.xlane.xlu0 %338
    %v340 = vsel %vm168, %v161, 0.0
    %341 = vadd.xlane.f32.xlu0 %v340
    %v342 = vpop.xlane.xlu0 %341
    %v343 = vsel %vm168, %v162, 0.0
    %344 = vadd.xlane.f32.xlu0 %v343
    %v345 = vpop.xlane.xlu0 %344
    %v346 = vsel %vm168, %v163, 0.0
    %347 = vadd.xlane.f32.xlu0 %v346
    %v348 = vpop.xlane.xlu0 %347
    %v349 = vsel %vm168, %v164, 0.0
    %350 = vadd.xlane.f32.xlu0 %v349
    %v351 = vpop.xlane.xlu0 %350
    %v352 = vsel %vm168, %v165, 0.0
    %353 = vadd.xlane.f32.xlu0 %v352
    %v354 = vpop.xlane.xlu0 %353
    %v355 = vsel %vm168, %v166, 0.0
    %356 = vadd.xlane.f32.xlu0 %v355
    %v357 = vpop.xlane.xlu0 %356
    %v358 = vsel %vm168, %v167, 0.0
    %359 = vadd.xlane.f32.xlu0 %v358
    %v360 = vpop.xlane.xlu0 %359
    %v361 = vmax.f32 %v171, 1e-10
    %v362 = vmax.f32 %v174, 1e-10
    %v363 = vmax.f32 %v177, 1e-10
    %v364 = vmax.f32 %v180, 1e-10
    %v365 = vmax.f32 %v183, 1e-10
    %v366 = vmax.f32 %v186, 1e-10
    %v367 = vmax.f32 %v189, 1e-10
    %v368 = vmax.f32 %v192, 1e-10
    %v369 = vmax.f32 %v195, 1e-10
    %v370 = vmax.f32 %v198, 1e-10
    %v371 = vmax.f32 %v201, 1e-10
    %v372 = vmax.f32 %v204, 1e-10
    %v373 = vmax.f32 %v207, 1e-10
    %v374 = vmax.f32 %v210, 1e-10
    %v375 = vmax.f32 %v213, 1e-10
    %v376 = vmax.f32 %v216, 1e-10
    %v377 = vmax.f32 %v219, 1e-10
    %v378 = vmax.f32 %v222, 1e-10
    %v379 = vmax.f32 %v225, 1e-10
    %v380 = vmax.f32 %v228, 1e-10
    %v381 = vmax.f32 %v231, 1e-10
    %v382 = vmax.f32 %v234, 1e-10
    %v383 = vmax.f32 %v237, 1e-10
    %v384 = vmax.f32 %v240, 1e-10
    %v385 = vmax.f32 %v243, 1e-10
    %v386 = vmax.f32 %v246, 1e-10
    %v387 = vmax.f32 %v249, 1e-10
    %v388 = vmax.f32 %v252, 1e-10
    %v389 = vmax.f32 %v255, 1e-10
    %v390 = vmax.f32 %v258, 1e-10
    %v391 = vmax.f32 %v261, 1e-10
    %v392 = vmax.f32 %v264, 1e-10
    %v393 = vmax.f32 %v267, 1e-10
    %v394 = vmax.f32 %v270, 1e-10
    %v395 = vmax.f32 %v273, 1e-10
    %v396 = vmax.f32 %v276, 1e-10
    %v397 = vmax.f32 %v279, 1e-10
    %v398 = vmax.f32 %v282, 1e-10
    %v399 = vmax.f32 %v285, 1e-10
    %v400 = vmax.f32 %v288, 1e-10
    %v401 = vmax.f32 %v291, 1e-10
    %v402 = vmax.f32 %v294, 1e-10
    %v403 = vmax.f32 %v297, 1e-10
    %v404 = vmax.f32 %v300, 1e-10
    %v405 = vmax.f32 %v303, 1e-10
    %v406 = vmax.f32 %v306, 1e-10
    %v407 = vmax.f32 %v309, 1e-10
    %v408 = vmax.f32 %v312, 1e-10
    %v409 = vmax.f32 %v315, 1e-10
    %v410 = vmax.f32 %v318, 1e-10
    %v411 = vmax.f32 %v321, 1e-10
    %v412 = vmax.f32 %v324, 1e-10
    %v413 = vmax.f32 %v327, 1e-10
    %v414 = vmax.f32 %v330, 1e-10
    %v415 = vmax.f32 %v333, 1e-10
    %v416 = vmax.f32 %v336, 1e-10
    %v417 = vmax.f32 %v339, 1e-10
    %v418 = vmax.f32 %v342, 1e-10
    %v419 = vmax.f32 %v345, 1e-10
    %v420 = vmax.f32 %v348, 1e-10
    %v421 = vmax.f32 %v351, 1e-10
    %v422 = vmax.f32 %v354, 1e-10
    %v423 = vmax.f32 %v357, 1e-10
    %v424 = vmax.f32 %v360, 1e-10
    %v425 = vrsqrt.pop %v361
    %v426 = vrsqrt.pop %v362
    %v427 = vrsqrt.pop %v363
    %v428 = vrsqrt.pop %v364
    %v429 = vrsqrt.pop %v365
    %v430 = vrsqrt.pop %v366
    %v431 = vrsqrt.pop %v367
    %v432 = vrsqrt.pop %v368
    %v433 = vrsqrt.pop %v369
    %v434 = vrsqrt.pop %v370
    %v435 = vrsqrt.pop %v371
    %v436 = vrsqrt.pop %v372
    %v437 = vrsqrt.pop %v373
    %v438 = vrsqrt.pop %v374
    %v439 = vrsqrt.pop %v375
    %v440 = vrsqrt.pop %v376
    %v441 = vrsqrt.pop %v377
    %v442 = vrsqrt.pop %v378
    %v443 = vrsqrt.pop %v379
    %v444 = vrsqrt.pop %v380
    %v445 = vrsqrt.pop %v381
    %v446 = vrsqrt.pop %v382
    %v447 = vrsqrt.pop %v383
    %v448 = vrsqrt.pop %v384
    %v449 = vrsqrt.pop %v385
    %v450 = vrsqrt.pop %v386
    %v451 = vrsqrt.pop %v387
    %v452 = vrsqrt.pop %v388
    %v453 = vrsqrt.pop %v389
    %v454 = vrsqrt.pop %v390
    %v455 = vrsqrt.pop %v391
    %v456 = vrsqrt.pop %v392
    %v457 = vrsqrt.pop %v393
    %v458 = vrsqrt.pop %v394
    %v459 = vrsqrt.pop %v395
    %v460 = vrsqrt.pop %v396
    %v461 = vrsqrt.pop %v397
    %v462 = vrsqrt.pop %v398
    %v463 = vrsqrt.pop %v399
    %v464 = vrsqrt.pop %v400
    %v465 = vrsqrt.pop %v401
    %v466 = vrsqrt.pop %v402
    %v467 = vrsqrt.pop %v403
    %v468 = vrsqrt.pop %v404
    %v469 = vrsqrt.pop %v405
    %v470 = vrsqrt.pop %v406
    %v471 = vrsqrt.pop %v407
    %v472 = vrsqrt.pop %v408
    %v473 = vrsqrt.pop %v409
    %v474 = vrsqrt.pop %v410
    %v475 = vrsqrt.pop %v411
    %v476 = vrsqrt.pop %v412
    %v477 = vrsqrt.pop %v413
    %v478 = vrsqrt.pop %v414
    %v479 = vrsqrt.pop %v415
    %v480 = vrsqrt.pop %v416
    %v481 = vrsqrt.pop %v417
    %v482 = vrsqrt.pop %v418
    %v483 = vrsqrt.pop %v419
    %v484 = vrsqrt.pop %v420
    %v485 = vrsqrt.pop %v421
    %v486 = vrsqrt.pop %v422
    %v487 = vrsqrt.pop %v423
    %v488 = vrsqrt.pop %v424
    %v489 = vmul.f32 %v38, %v425
    %v490 = vmul.f32 %v39, %v426
    %v491 = vmul.f32 %v40, %v427
    %v492 = vmul.f32 %v41, %v428
    %v493 = vmul.f32 %v42, %v429
    %v494 = vmul.f32 %v43, %v430
    %v495 = vmul.f32 %v44, %v431
    %v496 = vmul.f32 %v45, %v432
    %v497 = vmul.f32 %v46, %v433
    %v498 = vmul.f32 %v47, %v434
    %v499 = vmul.f32 %v48, %v435
    %v500 = vmul.f32 %v49, %v436
    %v501 = vmul.f32 %v50, %v437
    %v502 = vmul.f32 %v51, %v438
    %v503 = vmul.f32 %v52, %v439
    %v504 = vmul.f32 %v53, %v440
    %v505 = vmul.f32 %v54, %v441
    %v506 = vmul.f32 %v55, %v442
    %v507 = vmul.f32 %v56, %v443
    %v508 = vmul.f32 %v57, %v444
    %v509 = vmul.f32 %v58, %v445
    %v510 = vmul.f32 %v59, %v446
    %v511 = vmul.f32 %v60, %v447
    %v512 = vmul.f32 %v61, %v448
    %v513 = vmul.f32 %v62, %v449
    %v514 = vmul.f32 %v63, %v450
    %v515 = vmul.f32 %v64, %v451
    %v516 = vmul.f32 %v65, %v452
    %v517 = vmul.f32 %v66, %v453
    %v518 = vmul.f32 %v67, %v454
    %v519 = vmul.f32 %v68, %v455
    %v520 = vmul.f32 %v69, %v456
    %v521 = vmul.f32 %v70, %v457
    %v522 = vmul.f32 %v71, %v458
    %v523 = vmul.f32 %v72, %v459
    %v524 = vmul.f32 %v73, %v460
    %v525 = vmul.f32 %v74, %v461
    %v526 = vmul.f32 %v75, %v462
    %v527 = vmul.f32 %v76, %v463
    %v528 = vmul.f32 %v77, %v464
    %v529 = vmul.f32 %v78, %v465
    %v530 = vmul.f32 %v79, %v466
    %v531 = vmul.f32 %v80, %v467
    %v532 = vmul.f32 %v81, %v468
    %v533 = vmul.f32 %v82, %v469
    %v534 = vmul.f32 %v83, %v470
    %v535 = vmul.f32 %v84, %v471
    %v536 = vmul.f32 %v85, %v472
    %v537 = vmul.f32 %v86, %v473
    %v538 = vmul.f32 %v87, %v474
    %v539 = vmul.f32 %v88, %v475
    %v540 = vmul.f32 %v89, %v476
    %v541 = vmul.f32 %v90, %v477
    %v542 = vmul.f32 %v91, %v478
    %v543 = vmul.f32 %v92, %v479
    %v544 = vmul.f32 %v93, %v480
    %v545 = vmul.f32 %v94, %v481
    %v546 = vmul.f32 %v95, %v482
    %v547 = vmul.f32 %v96, %v483
    %v548 = vmul.f32 %v97, %v484
    %v549 = vmul.f32 %v98, %v485
    %v550 = vmul.f32 %v99, %v486
    %v551 = vmul.f32 %v100, %v487
    %v552 = vmul.f32 %v101, %v488
    %v554 = vsel %vm168, %v37, 0
    %v557 = vsel %vm168, %v489, 0
    %v560 = vsel %vm168, %v490, 0
    %v563 = vsel %vm168, %v491, 0
    %v566 = vsel %vm168, %v492, 0
    %v569 = vsel %vm168, %v493, 0
    %v572 = vsel %vm168, %v494, 0
    %v575 = vsel %vm168, %v495, 0
    %v578 = vsel %vm168, %v496, 0
    %v581 = vsel %vm168, %v497, 0
    %v584 = vsel %vm168, %v498, 0
    %v587 = vsel %vm168, %v499, 0
    %v590 = vsel %vm168, %v500, 0
    %v593 = vsel %vm168, %v501, 0
    %v596 = vsel %vm168, %v502, 0
    %v599 = vsel %vm168, %v503, 0
    %v602 = vsel %vm168, %v504, 0
    %v605 = vsel %vm168, %v505, 0
    %v608 = vsel %vm168, %v506, 0
    %v611 = vsel %vm168, %v507, 0
    %v614 = vsel %vm168, %v508, 0
    %v617 = vsel %vm168, %v509, 0
    %v620 = vsel %vm168, %v510, 0
    %v623 = vsel %vm168, %v511, 0
    %v626 = vsel %vm168, %v512, 0
    %v629 = vsel %vm168, %v513, 0
    %v632 = vsel %vm168, %v514, 0
    %v635 = vsel %vm168, %v515, 0
    %v638 = vsel %vm168, %v516, 0
    %v641 = vsel %vm168, %v517, 0
    %v644 = vsel %vm168, %v518, 0
    %v647 = vsel %vm168, %v519, 0
    %v650 = vsel %vm168, %v520, 0
    %v653 = vsel %vm168, %v521, 0
    %v656 = vsel %vm168, %v522, 0
    %v659 = vsel %vm168, %v523, 0
    %v662 = vsel %vm168, %v524, 0
    %v665 = vsel %vm168, %v525, 0
    %v668 = vsel %vm168, %v526, 0
    %v671 = vsel %vm168, %v527, 0
    %v674 = vsel %vm168, %v528, 0
    %v677 = vsel %vm168, %v529, 0
    %v680 = vsel %vm168, %v530, 0
    %v683 = vsel %vm168, %v531, 0
    %v686 = vsel %vm168, %v532, 0
    %v689 = vsel %vm168, %v533, 0
    %v692 = vsel %vm168, %v534, 0
    %v695 = vsel %vm168, %v535, 0
    %v698 = vsel %vm168, %v536, 0
    %v701 = vsel %vm168, %v537, 0
    %v704 = vsel %vm168, %v538, 0
    %v707 = vsel %vm168, %v539, 0
    %v710 = vsel %vm168, %v540, 0
    %v713 = vsel %vm168, %v541, 0
    %v716 = vsel %vm168, %v542, 0
    %v719 = vsel %vm168, %v543, 0
    %v722 = vsel %vm168, %v544, 0
    %v725 = vsel %vm168, %v545, 0
    %v728 = vsel %vm168, %v546, 0
    %v731 = vsel %vm168, %v547, 0
    %v734 = vsel %vm168, %v548, 0
    %v737 = vsel %vm168, %v549, 0
    %v740 = vsel %vm168, %v550, 0
    %v743 = vsel %vm168, %v551, 0
    %v746 = vsel %vm168, %v552, 0
    %748 = vmatprep.subr.mxu0 0.0
    %749 = vmatpush1.xpose.msra.mxu0 %v557
    %750 = vmatprep.subr.mxu0 0.0
    %751 = vmatpush1.xpose.msra.mxu0 %v560
    %752 = vmatprep.subr.mxu0 0.0
    %753 = vmatpush1.xpose.msra.mxu0 %v563
    %754 = vmatprep.subr.mxu0 0.0
    %755 = vmatpush1.xpose.msra.mxu0 %v566
    %756 = vmatprep.subr.mxu0 0.0
    %757 = vmatpush1.xpose.msra.mxu0 %v569
    %758 = vmatprep.subr.mxu0 0.0
    %759 = vmatpush1.xpose.msra.mxu0 %v572
    %760 = vmatprep.subr.mxu0 0.0
    %761 = vmatpush1.xpose.msra.mxu0 %v575
    %762 = vmatprep.subr.mxu0 0.0
    %763 = vmatpush1.xpose.msra.mxu0 %v578
    %764 = vmatprep.subr.mxu0 0.0
    %765 = vmatpush1.xpose.msra.mxu0 %v581
    %766 = vmatprep.subr.mxu0 0.0
    %767 = vmatpush1.xpose.msra.mxu0 %v584
    %768 = vmatprep.subr.mxu0 0.0
    %769 = vmatpush1.xpose.msra.mxu0 %v587
    %770 = vmatprep.subr.mxu0 0.0
    %771 = vmatpush1.xpose.msra.mxu0 %v590
    %772 = vmatprep.subr.mxu0 0.0
    %773 = vmatpush1.xpose.msra.mxu0 %v593
    %774 = vmatprep.subr.mxu0 0.0
    %775 = vmatpush1.xpose.msra.mxu0 %v596
    %776 = vmatprep.subr.mxu0 0.0
    %777 = vmatpush1.xpose.msra.mxu0 %v599
    %778 = vmatprep.subr.mxu0 0.0
    %779 = vmatpush1.xpose.msra.mxu0 %v602
    %780 = vmatprep.subr.mxu0 0.0
    %781 = vmatpush1.xpose.msra.mxu0 %v605
    %782 = vmatprep.subr.mxu0 0.0
    %783 = vmatpush1.xpose.msra.mxu0 %v608
    %784 = vmatprep.subr.mxu0 0.0
    %785 = vmatpush1.xpose.msra.mxu0 %v611
    %786 = vmatprep.subr.mxu0 0.0
    %787 = vmatpush1.xpose.msra.mxu0 %v614
    %788 = vmatprep.subr.mxu0 0.0
    %789 = vmatpush1.xpose.msra.mxu0 %v617
    %790 = vmatprep.subr.mxu0 0.0
    %791 = vmatpush1.xpose.msra.mxu0 %v620
    %792 = vmatprep.subr.mxu0 0.0
    %793 = vmatpush1.xpose.msra.mxu0 %v623
    %794 = vmatprep.subr.mxu0 0.0
    %795 = vmatpush1.xpose.msra.mxu0 %v626
    %796 = vmatprep.subr.mxu0 0.0
    %797 = vmatpush1.xpose.msra.mxu0 %v629
    %798 = vmatprep.subr.mxu0 0.0
    %799 = vmatpush1.xpose.msra.mxu0 %v632
    %800 = vmatprep.subr.mxu0 0.0
    %801 = vmatpush1.xpose.msra.mxu0 %v635
    %802 = vmatprep.subr.mxu0 0.0
    %803 = vmatpush1.xpose.msra.mxu0 %v638
    %804 = vmatprep.subr.mxu0 0.0
    %805 = vmatpush1.xpose.msra.mxu0 %v641
    %806 = vmatprep.subr.mxu0 0.0
    %807 = vmatpush1.xpose.msra.mxu0 %v644
    %808 = vmatprep.subr.mxu0 0.0
    %809 = vmatpush1.xpose.msra.mxu0 %v647
    %810 = vmatprep.subr.mxu0 0.0
    %811 = vmatpush1.xpose.msra.mxu0 %v650
    %812 = vmatprep.mubr.f32.mxu0 0.0
    %813 = vmatmul.mubr.f32.gmra.mrb[0].mxu0 %v554
    %v814 = vpop.f32.mrb[0].mxu0
    %v815 = vadd.f32 0.0, %v814
    %v816 = vpop.f32.mrb[0].mxu0
    %v817 = vadd.f32 0.0, %v816
    %818 = vdwg.mxu0
    %819 = vmatprep.subr.mxu0 0.0
    %820 = vmatpush1.xpose.msra.mxu0 %v653
    %821 = vmatprep.subr.mxu0 0.0
    %822 = vmatpush1.xpose.msra.mxu0 %v656
    %823 = vmatprep.subr.mxu0 0.0
    %824 = vmatpush1.xpose.msra.mxu0 %v659
    %825 = vmatprep.subr.mxu0 0.0
    %826 = vmatpush1.xpose.msra.mxu0 %v662
    %827 = vmatprep.subr.mxu0 0.0
    %828 = vmatpush1.xpose.msra.mxu0 %v665
    %829 = vmatprep.subr.mxu0 0.0
    %830 = vmatpush1.xpose.msra.mxu0 %v668
    %831 = vmatprep.subr.mxu0 0.0
    %832 = vmatpush1.xpose.msra.mxu0 %v671
    %833 = vmatprep.subr.mxu0 0.0
    %834 = vmatpush1.xpose.msra.mxu0 %v674
    %835 = vmatprep.subr.mxu0 0.0
    %836 = vmatpush1.xpose.msra.mxu0 %v677
    %837 = vmatprep.subr.mxu0 0.0
    %838 = vmatpush1.xpose.msra.mxu0 %v680
    %839 = vmatprep.subr.mxu0 0.0
    %840 = vmatpush1.xpose.msra.mxu0 %v683
    %841 = vmatprep.subr.mxu0 0.0
    %842 = vmatpush1.xpose.msra.mxu0 %v686
    %843 = vmatprep.subr.mxu0 0.0
    %844 = vmatpush1.xpose.msra.mxu0 %v689
    %845 = vmatprep.subr.mxu0 0.0
    %846 = vmatpush1.xpose.msra.mxu0 %v692
    %847 = vmatprep.subr.mxu0 0.0
    %848 = vmatpush1.xpose.msra.mxu0 %v695
    %849 = vmatprep.subr.mxu0 0.0
    %850 = vmatpush1.xpose.msra.mxu0 %v698
    %851 = vmatprep.subr.mxu0 0.0
    %852 = vmatpush1.xpose.msra.mxu0 %v701
    %853 = vmatprep.subr.mxu0 0.0
    %854 = vmatpush1.xpose.msra.mxu0 %v704
    %855 = vmatprep.subr.mxu0 0.0
    %856 = vmatpush1.xpose.msra.mxu0 %v707
    %857 = vmatprep.subr.mxu0 0.0
    %858 = vmatpush1.xpose.msra.mxu0 %v710
    %859 = vmatprep.subr.mxu0 0.0
    %860 = vmatpush1.xpose.msra.mxu0 %v713
    %861 = vmatprep.subr.mxu0 0.0
    %862 = vmatpush1.xpose.msra.mxu0 %v716
    %863 = vmatprep.subr.mxu0 0.0
    %864 = vmatpush1.xpose.msra.mxu0 %v719
    %865 = vmatprep.subr.mxu0 0.0
    %866 = vmatpush1.xpose.msra.mxu0 %v722
    %867 = vmatprep.subr.mxu0 0.0
    %868 = vmatpush1.xpose.msra.mxu0 %v725
    %869 = vmatprep.subr.mxu0 0.0
    %870 = vmatpush1.xpose.msra.mxu0 %v728
    %871 = vmatprep.subr.mxu0 0.0
    %872 = vmatpush1.xpose.msra.mxu0 %v731
    %873 = vmatprep.subr.mxu0 0.0
    %874 = vmatpush1.xpose.msra.mxu0 %v734
    %875 = vmatprep.subr.mxu0 0.0
    %876 = vmatpush1.xpose.msra.mxu0 %v737
    %877 = vmatprep.subr.mxu0 0.0
    %878 = vmatpush1.xpose.msra.mxu0 %v740
    %879 = vmatprep.subr.mxu0 0.0
    %880 = vmatpush1.xpose.msra.mxu0 %v743
    %881 = vmatprep.subr.mxu0 0.0
    %882 = vmatpush1.xpose.msra.mxu0 %v746
    %883 = vmatprep.mubr.f32.mxu0 0.0
    %884 = vmatmul.mubr.f32.gmra.mrb[0].mxu0 %v554
    %v885 = vpop.f32.mrb[0].mxu0
    %v886 = vadd.f32 0.0, %v885
    %v887 = vpop.f32.mrb[0].mxu0
    %v888 = vadd.f32 0.0, %v887
    %889 = vdwg.mxu0
    %v890 = vmul.f32 %v815, 64.0
    %v891 = vmul.f32 %v817, 64.0
    %v892 = vmul.f32 %v886, 64.0
    %v893 = vmul.f32 %v888, 64.0
    %v894 = vstv %s103
    %v895 = vsub.f32 %v890, %v894
    %v896 = vsub.f32 %v891, %v894
    %v897 = vsub.f32 %v892, %v894
    %v898 = vsub.f32 %v893, %v894
    %v899 = vmax.f32 %v895, -64.0
    %v900 = vmax.f32 %v896, -64.0
    %v901 = vmax.f32 %v897, -64.0
    %v902 = vmax.f32 %v898, -64.0
    %v903 = vmin.f32 %v899, 64.0
    %v904 = vmin.f32 %v900, 64.0
    %v905 = vmin.f32 %v901, 64.0
    %v906 = vmin.f32 %v902, 64.0
    %v907 = vmul.f32 %v903, 1.442695
    %v908 = vpow.pop %v907
    %v909 = vmul.f32 %v904, 1.442695
    %v910 = vpow.pop %v909
    %v911 = vmul.f32 %v905, 1.442695
    %v912 = vpow.pop %v911
    %v913 = vmul.f32 %v906, 1.442695
    %v914 = vpow.pop %v913
    %v915 = vadd.f32 %v908, 1.0
    %v916 = vadd.f32 %v910, 1.0
    %v917 = vadd.f32 %v912, 1.0
    %v918 = vadd.f32 %v914, 1.0
    %v919 = vlog2.pop %v915
    %v920 = vmul.f32 %v919, 0.6931472
    %v921 = vlog2.pop %v916
    %v922 = vmul.f32 %v921, 0.6931472
    %v923 = vlog2.pop %v917
    %v924 = vmul.f32 %v923, 0.6931472
    %v925 = vlog2.pop %v918
    %v926 = vmul.f32 %v925, 0.6931472
    %v927 = vlaneseq
    %v928 = vand.u32 %v927, 127
    %v929 = vadd.s32 %v928, 128
    %v930 = vadd.s32 %v928, 256
    %v931 = vadd.s32 %v928, 384
    %s932 = smul.u32 0, 512
    %v933 = vstv %s932
    %v934 = vadd.s32 %v928, %v933
    %v935 = vadd.s32 %v929, %v933
    %v936 = vadd.s32 %v930, %v933
    %v937 = vadd.s32 %v931, %v933
    %938 = vset.pattern.permute.xlu0 0
    %939 = vperm.xlu0 %938, %v102
    %v940 = vpop.permute.xlu0 %939
    %vm941 = vcmp.eq.s32.totalorder %v934, %v940
    %vm942 = vcmp.eq.s32.totalorder %v935, %v940
    %vm943 = vcmp.eq.s32.totalorder %v936, %v940
    %vm944 = vcmp.eq.s32.totalorder %v937, %v940
    %v945 = vsel %vm941, %v815, 0.0
    %v946 = vsel %vm942, %v817, 0.0
    %v947 = vsel %vm943, %v886, 0.0
    %v948 = vsel %vm944, %v888, 0.0
    %v949 = vadd.f32 %v945, %v946
    %v950 = vadd.f32 %v949, %v947
    %v951 = vadd.f32 %v950, %v948
    %952 = vadd.xlane.f32.xlu0 %v951
    %v953 = vpop.xlane.xlu0 %952
    %vm954 = vcmp.ge.s32.totalorder %v102, %v933
    %s955 = sadd.s32 %s932, 512
    %v956 = vstv %s955
    %vm957 = vcmp.lt.s32.totalorder %v102, %v956
    %vm958 = vmand %vm954, %vm957
    %v959 = vsub.f32 %v953, 0.4
    %v960 = vmul.f32 %v959, 64.0
    %v961 = vsub.f32 %v960, %v894
    %v962 = vmax.f32 %v961, -64.0
    %v963 = vmin.f32 %v962, 64.0
    %v964 = vsub.f32 0.0, %v963
    %v965 = vmul.f32 %v964, 1.442695
    %v966 = vpow.pop %v965
    %v967 = vadd.f32 %v966, 1.0
    %v968 = vlog2.pop %v967
    %v969 = vmul.f32 %v968, 0.6931472
    %v970 = vmul.f32 %v953, 64.0
    %v971 = vsub.f32 %v970, %v894
    %v972 = vmax.f32 %v971, -64.0
    %v973 = vmin.f32 %v972, 64.0
    %v974 = vmul.f32 %v973, 1.442695
    %v975 = vpow.pop %v974
    %v976 = vadd.f32 %v975, 1.0
    %v977 = vlog2.pop %v976
    %v978 = vmul.f32 %v977, 0.6931472
    %v979 = vsub.f32 %v969, %v978
    %v980 = vsel %vm958, %v979, 0.0
    %v981 = vld [vmem:[#allocation3] sm:$0xff]
    %v982 = vld [vmem:[#allocation3 + $0x8] sm:$0xff]
    %v983 = vld [vmem:[#allocation3 + $0x10] sm:$0xff]
    %v984 = vld [vmem:[#allocation3 + $0x18] sm:$0xff]
    %v985 = vadd.f32 %v981, %v920
    %v986 = vadd.f32 %v982, %v922
    %v987 = vadd.f32 %v983, %v924
    %v988 = vadd.f32 %v984, %v926
    %989 = vst [vmem:[#allocation3] sm:$0xff] %v985
    %990 = vst [vmem:[#allocation3 + $0x8] sm:$0xff] %v986
    %991 = vst [vmem:[#allocation3 + $0x10] sm:$0xff] %v987
    %992 = vst [vmem:[#allocation3 + $0x18] sm:$0xff] %v988
    %v993 = vld [vmem:[#allocation3] sm:$0xff]
    %v994 = vadd.f32 %v993, %v980
    %vm995 = vcmask 7168
    %996 = vst.msk [vmem:[#allocation3] sm:$0xff] %vm995, %v994
    // Predicated region
    $region22: #{tpu_custom_call.1} parent=1 // pred_check
      %p997 = pneg %p19
    $region23: #{tpu_custom_call.1} parent=1 // pred_check_branch
      %999 = sbr.rel (%p997) target = $region25
    $region24: #{tpu_custom_call.1} parent=1 // pred_region
      %v1000 = vld [vmem:[#allocation3] sm:$0xff]
      %v1001 = vld [vmem:[#allocation3 + $0x8] sm:$0xff]
      %v1002 = vld [vmem:[#allocation3 + $0x10] sm:$0xff]
      %v1003 = vld [vmem:[#allocation3 + $0x18] sm:$0xff]
      %v1004 = vadd.f32 %v1000, %v1001
      %v1005 = vadd.f32 %v1004, %v1002
      %v1006 = vadd.f32 %v1005, %v1003
      %1007 = vadd.xlane.f32.xlu0 %v1006
      %v1008 = vpop.xlane.xlu0 %1007
      %v1009 = vrot.slane %v1008, 4
      %v1010 = vadd.f32 %v1008, %v1009
      %v1011 = vrot.slane %v1010, 2
      %v1012 = vadd.f32 %v1010, %v1011
      %v1013 = vrot.slane %v1012, 1
      %v1014 = vadd.f32 %v1012, %v1013
      %s1015 = vtos %v1014
      %s1016 = scalar_lea.smem [#allocation5], 0
      %1017 = sst [smem:[%s1016]] %s1015
    $region25: #{tpu_custom_call.1} parent=1 // pred_fallthru
      _
    // Predicated region
    $region26: #{tpu_custom_call.1} parent=1 // pred_check
      _
    $region27: #{tpu_custom_call.1} parent=1 // pred_check_branch
      %1019 = sbr.rel (0) target = $region29
    $region28: #{tpu_custom_call.1} parent=1 // pred_region
      %s1021 = ssub.s32 16, 16
      %1022 = vsyncadd [#allocation6], %s1021
      %1025 = dma.smem_to_hbm [#allocation5], 16, %s4, [#allocation6]
    $region29: #{tpu_custom_call.1} parent=1 // pred_fallthru
      _
    // Predicated region
    $region30: #{tpu_custom_call.1} parent=1 // pred_check
      _
    $region31: #{tpu_custom_call.1} parent=1 // pred_check_branch
      %1027 = sbr.rel (0) target = $region33
    $region32: #{tpu_custom_call.1} parent=1 // pred_region
      %1028 = dma.done [#allocation6], 16
    $region33: #{tpu_custom_call.1} parent=1 // pred_fallthru
      _
    %1029 = sfence
    %1030 = vsyncpa [#allocation6], 1

</llo_original>
